<compile_context>
chip_gen: v7x
topology: tpu7x:2x2x1
jax: 0.10.0
libtpu: 0.0.40
codegen_flags: <defaults>
</compile_context>

<pallas_src>
import numpy as np
import jax
import jax.numpy as jnp
from jax.experimental import pallas as pl
from jax.experimental.pallas import tpu as pltpu

LANE = 128


def _round_up(x, m):
    return (x + m - 1) // m * m


def make_cnn_kernel(max_fs):
    """Fused: embedding gather -> conv(all filter sizes) -> ReLU -> masked
    max-pool over time -> FC, for one batch tile."""

    def kernel(ids_ref, table_ref, w_ref, b_ref, lim_ref, fcw_ref, fcb_ref, out_ref):
        ids = ids_ref[...]                                # [TB, S] int32
        TB, S = ids.shape
        V, E = table_ref.shape
        N = w_ref.shape[-1]                               # padded filter-bank width (128)
        R = max_fs - 1
        S_pad = S + R
        M = TB * S_pad

        # ---- embedding gather as a one-hot matmul (keeps [TB,S,E] in VMEM) ----
        onehot3 = (jax.lax.broadcasted_iota(jnp.int32, (TB, S, V), 2)
                   == ids[:, :, None]).astype(jnp.float32)          # [TB, S, V]
        onehot = onehot3.reshape(TB * S, V)
        emb = jnp.dot(onehot, table_ref[...],
                      preferred_element_type=jnp.float32)           # [TB*S, E] f32 (exact)

        # ---- zero-pad each sequence by R rows, flatten to one lane-dense slab ----
        emb3 = emb.reshape(TB, S, E)
        emb_pad = jnp.concatenate(
            [emb3, jnp.zeros((TB, R, E), jnp.float32)], axis=1)     # [TB, S_pad, E]
        flat = emb_pad.reshape(M, E).astype(jnp.bfloat16)
        flat = jnp.concatenate(
            [flat, jnp.zeros((R, E), jnp.bfloat16)], axis=0)        # [M+R, E]

        # ---- fused conv: tap accumulation over one padded N=128 filter bank ----
        acc = jnp.dot(flat[0:M, :], w_ref[0],
                      preferred_element_type=jnp.float32)           # [M, N] f32
        for j in range(1, max_fs):                                  # static unroll
            acc = acc + jnp.dot(flat[j:j + M, :], w_ref[j],
                                preferred_element_type=jnp.float32)

        scores = jnp.maximum(acc + b_ref[...], 0.0)                 # bias + ReLU
        scores3 = scores.reshape(TB, S_pad, N)

        # mask positions beyond each filter's valid range (post-ReLU => 0 is safe)
        t_iota = jax.lax.broadcasted_iota(jnp.int32, (TB, S_pad, N), 1)
        valid = t_iota < lim_ref[...][None, :, :]                   # [TB, S_pad, N]
        pooled = jnp.max(jnp.where(valid, scores3, 0.0), axis=1)    # [TB, N]

        # ---- FC on the already-fused pooled bank (no concatenate), lane-dense out ----
        out = jnp.dot(pooled, fcw_ref[...],
                      preferred_element_type=jnp.float32) + fcb_ref[...]
        out_ref[...] = out.astype(out_ref.dtype)

    return kernel


def cnn_forward(text, emb_table, conv_weights, conv_biases, fc_w, fc_b,
                filter_sizes, n_filters, output_dim):
    """text: [B, S] int32 token ids.
    conv_weights[g]: [n_filters, 1, fs_g, E] (PyTorch Conv2d layout)
    conv_biases[g]:  [n_filters]
    fc_w: [output_dim, len(filter_sizes)*n_filters] (PyTorch Linear layout)
    fc_b: [output_dim]
    """
    B, S = text.shape
    V, E = emb_table.shape
    G = len(filter_sizes)
    Gn = G * n_filters
    max_fs = max(filter_sizes)
    N = _round_up(Gn, LANE)              # fused filter-bank width, lane-dense
    OUTP = _round_up(output_dim, LANE)   # lane-dense output width

    # --- pack all conv filters into one [max_fs, E, N] tap bank (bf16) ---
    taps = []
    for j in range(max_fs):
        cols = []
        for g, fs in enumerate(filter_sizes):
            wg = conv_weights[g].astype(jnp.float32).reshape(n_filters, fs, E)
            if j < fs:
                cols.append(wg[:, j, :].T)                          # [E, F]
            else:
                cols.append(jnp.zeros((E, n_filters), jnp.float32))
        taps.append(jnp.concatenate(cols, axis=1))                  # [E, Gn]
    w_fused = jnp.stack(taps, axis=0)                               # [max_fs, E, Gn]
    w_fused = jnp.pad(w_fused, ((0, 0), (0, 0), (0, N - Gn))).astype(jnp.bfloat16)

    b_fused = jnp.pad(jnp.concatenate(
        [b.astype(jnp.float32) for b in conv_biases])[None, :], ((0, 0), (0, N - Gn)))

    lim_list = []
    for fs in filter_sizes:
        lim_list += [S - fs + 1] * n_filters
    lim_list += [0] * (N - Gn)
    limits = jnp.asarray(np.asarray(lim_list, np.int32)[None, :])   # [1, N]

    # --- pad FC to lane-dense [N, OUTP] (zero rows/cols contribute nothing) ---
    fcw = jnp.pad(fc_w.T.astype(jnp.float32), ((0, N - Gn), (0, OUTP - output_dim)))
    fcb = jnp.pad(fc_b.reshape(1, -1).astype(jnp.float32), ((0, 0), (0, OUTP - output_dim)))

    TB = B                                # batch tile: whole batch at toy sizes;
    grid = (pl.cdiv(B, TB),)              # shrink TB when scaling B (v7x: 64 MiB VMEM)

    kernel = make_cnn_kernel(max_fs)
    out_pad = pl.pallas_call(
        kernel,
        out_shape=jax.ShapeDtypeStruct((B, OUTP), jnp.float32),
        grid=grid,
        in_specs=[
            pl.BlockSpec((TB, S), lambda b: (b, 0)),                 # token ids
            pl.BlockSpec((V, E), lambda b: (0, 0)),                  # embedding table
            pl.BlockSpec((max_fs, E, N), lambda b: (0, 0, 0)),       # fused conv taps
            pl.BlockSpec((1, N), lambda b: (0, 0)),                  # fused conv bias
            pl.BlockSpec((1, N), lambda b: (0, 0)),                  # valid-length limits
            pl.BlockSpec((N, OUTP), lambda b: (0, 0)),               # padded FC weight
            pl.BlockSpec((1, OUTP), lambda b: (0, 0)),               # padded FC bias
        ],
        out_specs=pl.BlockSpec((TB, OUTP), lambda b: (b, 0)),
        compiler_params=pltpu.CompilerParams(
            dimension_semantics=("parallel",),
            vmem_limit_bytes=32 * 1024 * 1024),
    )(text.astype(jnp.int32), emb_table.astype(jnp.float32),
      w_fused, b_fused, limits, fcw, fcb)

    return out_pad[:, :output_dim]


def cnn_reference(text, emb_table, conv_weights, conv_biases, fc_w, fc_b,
                  filter_sizes, n_filters):
    """Plain-JAX f32 reference mirroring the PyTorch forward (eval mode)."""
    emb = emb_table[text].astype(jnp.float32)                       # [B, S, E]
    B, S, E = emb.shape
    pooled = []
    for g, fs in enumerate(filter_sizes):
        w = conv_weights[g].astype(jnp.float32).reshape(n_filters, fs * E)
        b = conv_biases[g].astype(jnp.float32)
        L = S - fs + 1
        cols = jnp.concatenate([emb[:, j:j + L, :] for j in range(fs)], axis=-1)
        scores = jnp.einsum("blk,fk->blf", cols, w) + b[None, None, :]
        scores = jnp.maximum(scores, 0.0)
        pooled.append(jnp.max(scores, axis=1))
    cat = jnp.concatenate(pooled, axis=-1)
    return cat @ fc_w.T + fc_b[None, :]


if __name__ == "__main__":
    # Small, deterministic configuration consistent with the module's __init__.
    vocab_size, embedding_dim = 50, 32
    n_filters = 8
    filter_sizes = (3, 4, 5)
    output_dim = 4
    dropout = 0.5          # eval mode -> identity
    pad_idx = 1            # reference builds nn.Embedding without padding-specific handling
    batch, seq_len = 2, 16

    key = jax.random.PRNGKey(0)
    keys = jax.random.split(key, 10)

    # nn.Embedding weight: [vocab_size, embedding_dim]
    emb_table = 0.1 * jax.random.normal(keys[0], (vocab_size, embedding_dim), jnp.float32)

    # nn.Conv2d(1, n_filters, (fs, E)) weights: [n_filters, 1, fs, E]; bias [n_filters]
    conv_weights, conv_biases = [], []
    for i, fs in enumerate(filter_sizes):
        w = 0.05 * jax.random.normal(keys[1 + i], (n_filters, 1, fs, embedding_dim), jnp.float32)
        b = 0.05 * jax.random.normal(keys[4 + i], (n_filters,), jnp.float32)
        conv_weights.append(w)
        conv_biases.append(b)

    # nn.Linear(len(fs)*n_filters, output_dim): weight [out, in], bias [out]
    fc_in = len(filter_sizes) * n_filters
    fc_w = 0.05 * jax.random.normal(keys[7], (output_dim, fc_in), jnp.float32)
    fc_b = 0.05 * jax.random.normal(keys[8], (output_dim,), jnp.float32)

    # Token ids: [batch, seq_len] int32 (PyTorch batch-first text input).
    text = jax.random.randint(keys[9], (batch, seq_len), 0, vocab_size, dtype=jnp.int32)

    out = cnn_forward(text, emb_table, conv_weights, conv_biases, fc_w, fc_b,
                      filter_sizes, n_filters, output_dim)
    out = jax.block_until_ready(out)

    ref = cnn_reference(text, emb_table, conv_weights, conv_biases, fc_w, fc_b,
                        filter_sizes, n_filters)
    assert out.shape == (batch, output_dim)
    # Conv matmuls use bf16 inputs (f32 accumulate), so compare against the f32
    # reference with a tolerance that covers bf16 input rounding.
    assert jnp.allclose(out, ref, atol=1e-2, rtol=1e-2), (out, ref)

    print("KERNEL_OK")
</pallas_src>

<mosaic_0001>
module attributes {stable_mosaic.version = 11 : i64} {
  func.func @kernel(%arg0: i32, %arg1: memref<2x16xi32, #tpu.memory_space<vmem>>, %arg2: memref<50x32xf32, #tpu.memory_space<vmem>>, %arg3: memref<5x32x128xbf16, #tpu.memory_space<vmem>>, %arg4: memref<1x128xf32, #tpu.memory_space<vmem>>, %arg5: memref<1x128xi32, #tpu.memory_space<vmem>>, %arg6: memref<128x128xf32, #tpu.memory_space<vmem>>, %arg7: memref<1x128xf32, #tpu.memory_space<vmem>>, %arg8: memref<2x128xf32, #tpu.memory_space<vmem>>) attributes {dimension_semantics = [#tpu.dimension_semantics<parallel>], iteration_bounds = array<i64: 1>, scalar_prefetch = 0 : i64, scratch_operands = 0 : i64, tpu.core_type = #tpu.core_type<tc>, window_params = [{transform_indices = @transform_0, window_bounds = array<i64: 2, 16>}, {pipeline_mode = #tpu.pipeline_mode<synchronous>, transform_indices = @transform_1, window_bounds = array<i64: 50, 32>}, {pipeline_mode = #tpu.pipeline_mode<synchronous>, transform_indices = @transform_2, window_bounds = array<i64: 5, 32, 128>}, {pipeline_mode = #tpu.pipeline_mode<synchronous>, transform_indices = @transform_3, window_bounds = array<i64: 1, 128>}, {pipeline_mode = #tpu.pipeline_mode<synchronous>, transform_indices = @transform_4, window_bounds = array<i64: 1, 128>}, {pipeline_mode = #tpu.pipeline_mode<synchronous>, transform_indices = @transform_5, window_bounds = array<i64: 128, 128>}, {pipeline_mode = #tpu.pipeline_mode<synchronous>, transform_indices = @transform_6, window_bounds = array<i64: 1, 128>}, {transform_indices = @transform_7, window_bounds = array<i64: 2, 128>}]} {
    %c0 = arith.constant 0 : index
    %c0_0 = arith.constant 0 : index
    %0 = vector.load %arg1[%c0, %c0_0] : memref<2x16xi32, #tpu.memory_space<vmem>>, vector<2x16xi32>
    %1 = tpu.iota {dimensions = array<i32: 2>} : vector<2x16x50xi32>
    %2 = vector.shape_cast %0 : vector<2x16xi32> to vector<2x16x1xi32>
    %3 = vector.broadcast %2 : vector<2x16x1xi32> to vector<2x16x50xi32>
    %4 = arith.cmpi eq, %1, %3 : vector<2x16x50xi32>
    %5 = arith.extui %4 : vector<2x16x50xi1> to vector<2x16x50xi32>
    %6 = arith.sitofp %5 : vector<2x16x50xi32> to vector<2x16x50xf32>
    %7 = vector.shape_cast %6 : vector<2x16x50xf32> to vector<32x50xf32>
    %c0_1 = arith.constant 0 : index
    %c0_2 = arith.constant 0 : index
    %8 = vector.load %arg2[%c0_1, %c0_2] : memref<50x32xf32, #tpu.memory_space<vmem>>, vector<50x32xf32>
    %cst = arith.constant dense<0.000000e+00> : vector<32x32xf32>
    %9 = tpu.matmul %7, %8, %cst {dimension_numbers = #tpu.dot_dimension_numbers<[1], [0], [0], [1], [0, 0, 1, 1], [], []>} : vector<32x50xf32>, vector<50x32xf32>, vector<32x32xf32> -> vector<32x32xf32>
    %10 = vector.shape_cast %9 : vector<32x32xf32> to vector<2x16x32xf32>
    %cst_3 = arith.constant 0.000000e+00 : f32
    %11 = vector.broadcast %cst_3 : f32 to vector<2x4x32xf32>
    %12 = tpu.concatenate %10, %11 in 1 : vector<2x16x32xf32>, vector<2x4x32xf32> -> vector<2x20x32xf32>
    %13 = vector.shape_cast %12 : vector<2x20x32xf32> to vector<40x32xf32>
    %14 = arith.truncf %13 : vector<40x32xf32> to vector<40x32xbf16>
    %cst_4 = arith.constant 0.000000e+00 : bf16
    %15 = vector.broadcast %cst_4 : bf16 to vector<4x32xbf16>
    %16 = tpu.concatenate %14, %15 in 0 : vector<40x32xbf16>, vector<4x32xbf16> -> vector<44x32xbf16>
    %17 = vector.extract_strided_slice %16 {offsets = [0, 0], sizes = [40, 32], strides = [1, 1]} : vector<44x32xbf16> to vector<40x32xbf16>
    %c0_5 = arith.constant 0 : index
    %c0_6 = arith.constant 0 : index
    %c0_7 = arith.constant 0 : index
    %18 = vector.load %arg3[%c0_5, %c0_6, %c0_7] : memref<5x32x128xbf16, #tpu.memory_space<vmem>>, vector<1x32x128xbf16>
    %19 = vector.shape_cast %18 : vector<1x32x128xbf16> to vector<32x128xbf16>
    %cst_8 = arith.constant dense<0.000000e+00> : vector<40x128xf32>
    %20 = tpu.matmul %17, %19, %cst_8 {dimension_numbers = #tpu.dot_dimension_numbers<[1], [0], [0], [1], [0, 0, 1, 1], [], []>} : vector<40x32xbf16>, vector<32x128xbf16>, vector<40x128xf32> -> vector<40x128xf32>
    %21 = vector.extract_strided_slice %16 {offsets = [1, 0], sizes = [40, 32], strides = [1, 1]} : vector<44x32xbf16> to vector<40x32xbf16>
    %c1 = arith.constant 1 : index
    %c0_9 = arith.constant 0 : index
    %c0_10 = arith.constant 0 : index
    %22 = vector.load %arg3[%c1, %c0_9, %c0_10] : memref<5x32x128xbf16, #tpu.memory_space<vmem>>, vector<1x32x128xbf16>
    %23 = vector.shape_cast %22 : vector<1x32x128xbf16> to vector<32x128xbf16>
    %cst_11 = arith.constant dense<0.000000e+00> : vector<40x128xf32>
    %24 = tpu.matmul %21, %23, %cst_11 {dimension_numbers = #tpu.dot_dimension_numbers<[1], [0], [0], [1], [0, 0, 1, 1], [], []>} : vector<40x32xbf16>, vector<32x128xbf16>, vector<40x128xf32> -> vector<40x128xf32>
    %25 = arith.addf %20, %24 : vector<40x128xf32>
    %26 = vector.extract_strided_slice %16 {offsets = [2, 0], sizes = [40, 32], strides = [1, 1]} : vector<44x32xbf16> to vector<40x32xbf16>
    %c2 = arith.constant 2 : index
    %c0_12 = arith.constant 0 : index
    %c0_13 = arith.constant 0 : index
    %27 = vector.load %arg3[%c2, %c0_12, %c0_13] : memref<5x32x128xbf16, #tpu.memory_space<vmem>>, vector<1x32x128xbf16>
    %28 = vector.shape_cast %27 : vector<1x32x128xbf16> to vector<32x128xbf16>
    %cst_14 = arith.constant dense<0.000000e+00> : vector<40x128xf32>
    %29 = tpu.matmul %26, %28, %cst_14 {dimension_numbers = #tpu.dot_dimension_numbers<[1], [0], [0], [1], [0, 0, 1, 1], [], []>} : vector<40x32xbf16>, vector<32x128xbf16>, vector<40x128xf32> -> vector<40x128xf32>
    %30 = arith.addf %25, %29 : vector<40x128xf32>
    %31 = vector.extract_strided_slice %16 {offsets = [3, 0], sizes = [40, 32], strides = [1, 1]} : vector<44x32xbf16> to vector<40x32xbf16>
    %c3 = arith.constant 3 : index
    %c0_15 = arith.constant 0 : index
    %c0_16 = arith.constant 0 : index
    %32 = vector.load %arg3[%c3, %c0_15, %c0_16] : memref<5x32x128xbf16, #tpu.memory_space<vmem>>, vector<1x32x128xbf16>
    %33 = vector.shape_cast %32 : vector<1x32x128xbf16> to vector<32x128xbf16>
    %cst_17 = arith.constant dense<0.000000e+00> : vector<40x128xf32>
    %34 = tpu.matmul %31, %33, %cst_17 {dimension_numbers = #tpu.dot_dimension_numbers<[1], [0], [0], [1], [0, 0, 1, 1], [], []>} : vector<40x32xbf16>, vector<32x128xbf16>, vector<40x128xf32> -> vector<40x128xf32>
    %35 = arith.addf %30, %34 : vector<40x128xf32>
    %36 = vector.extract_strided_slice %16 {offsets = [4, 0], sizes = [40, 32], strides = [1, 1]} : vector<44x32xbf16> to vector<40x32xbf16>
    %c4 = arith.constant 4 : index
    %c0_18 = arith.constant 0 : index
    %c0_19 = arith.constant 0 : index
    %37 = vector.load %arg3[%c4, %c0_18, %c0_19] : memref<5x32x128xbf16, #tpu.memory_space<vmem>>, vector<1x32x128xbf16>
    %38 = vector.shape_cast %37 : vector<1x32x128xbf16> to vector<32x128xbf16>
    %cst_20 = arith.constant dense<0.000000e+00> : vector<40x128xf32>
    %39 = tpu.matmul %36, %38, %cst_20 {dimension_numbers = #tpu.dot_dimension_numbers<[1], [0], [0], [1], [0, 0, 1, 1], [], []>} : vector<40x32xbf16>, vector<32x128xbf16>, vector<40x128xf32> -> vector<40x128xf32>
    %40 = arith.addf %35, %39 : vector<40x128xf32>
    %c0_21 = arith.constant 0 : index
    %c0_22 = arith.constant 0 : index
    %41 = vector.load %arg4[%c0_21, %c0_22] : memref<1x128xf32, #tpu.memory_space<vmem>>, vector<1x128xf32>
    %42 = vector.broadcast %41 : vector<1x128xf32> to vector<40x128xf32>
    %43 = arith.addf %40, %42 : vector<40x128xf32>
    %cst_23 = arith.constant 0.000000e+00 : f32
    %44 = vector.broadcast %cst_23 : f32 to vector<40x128xf32>
    %45 = arith.maximumf %43, %44 : vector<40x128xf32>
    %46 = vector.shape_cast %45 : vector<40x128xf32> to vector<2x20x128xf32>
    %47 = tpu.iota {dimensions = array<i32: 1>} : vector<2x20x128xi32>
    %c0_24 = arith.constant 0 : index
    %c0_25 = arith.constant 0 : index
    %48 = vector.load %arg5[%c0_24, %c0_25] : memref<1x128xi32, #tpu.memory_space<vmem>>, vector<1x128xi32>
    %49 = vector.shape_cast %48 : vector<1x128xi32> to vector<1x1x128xi32>
    %50 = vector.broadcast %49 : vector<1x1x128xi32> to vector<2x20x128xi32>
    %51 = arith.cmpi slt, %47, %50 : vector<2x20x128xi32>
    %cst_26 = arith.constant 0.000000e+00 : f32
    %52 = vector.broadcast %cst_26 : f32 to vector<2x20x128xf32>
    %53 = arith.select %51, %46, %52 : vector<2x20x128xi1>, vector<2x20x128xf32>
    %cst_27 = arith.constant dense<0xFF800000> : vector<2x128xf32>
    %54 = vector.multi_reduction <maximumf>, %53, %cst_27 [1] : vector<2x20x128xf32> to vector<2x128xf32>
    %c0_28 = arith.constant 0 : index
    %c0_29 = arith.constant 0 : index
    %55 = vector.load %arg6[%c0_28, %c0_29] : memref<128x128xf32, #tpu.memory_space<vmem>>, vector<128x128xf32>
    %cst_30 = arith.constant dense<0.000000e+00> : vector<2x128xf32>
    %56 = tpu.matmul %54, %55, %cst_30 {dimension_numbers = #tpu.dot_dimension_numbers<[1], [0], [0], [1], [0, 0, 1, 1], [], []>} : vector<2x128xf32>, vector<128x128xf32>, vector<2x128xf32> -> vector<2x128xf32>
    %c0_31 = arith.constant 0 : index
    %c0_32 = arith.constant 0 : index
    %57 = vector.load %arg7[%c0_31, %c0_32] : memref<1x128xf32, #tpu.memory_space<vmem>>, vector<1x128xf32>
    %58 = vector.broadcast %57 : vector<1x128xf32> to vector<2x128xf32>
    %59 = arith.addf %56, %58 : vector<2x128xf32>
    %c0_33 = arith.constant 0 : index
    %c0_34 = arith.constant 0 : index
    %60 = vector.load %arg8[%c0_33, %c0_34] : memref<2x128xf32, #tpu.memory_space<vmem>>, vector<2x128xf32>
    tpu.vector_store %arg8[%c0_33, %c0_34], %59 {strides = array<i32>} : memref<2x128xf32, #tpu.memory_space<vmem>>, vector<2x128xf32>,
    return
  }
  func.func @transform_0(%arg0: i32) -> (i32, i32) {
    %c0_i32 = arith.constant 0 : i32
    %c0_i32_0 = arith.constant 0 : i32
    return %arg0, %c0_i32 : i32, i32
  }
  func.func @transform_1(%arg0: i32) -> (i32, i32) {
    %c0_i32 = arith.constant 0 : i32
    %c0_i32_0 = arith.constant 0 : i32
    %c0_i32_1 = arith.constant 0 : i32
    return %c0_i32, %c0_i32_0 : i32, i32
  }
  func.func @transform_2(%arg0: i32) -> (i32, i32, i32) {
    %c0_i32 = arith.constant 0 : i32
    %c0_i32_0 = arith.constant 0 : i32
    %c0_i32_1 = arith.constant 0 : i32
    %c0_i32_2 = arith.constant 0 : i32
    return %c0_i32, %c0_i32_0, %c0_i32_1 : i32, i32, i32
  }
  func.func @transform_3(%arg0: i32) -> (i32, i32) {
    %c0_i32 = arith.constant 0 : i32
    %c0_i32_0 = arith.constant 0 : i32
    %c0_i32_1 = arith.constant 0 : i32
    return %c0_i32, %c0_i32_0 : i32, i32
  }
  func.func @transform_4(%arg0: i32) -> (i32, i32) {
    %c0_i32 = arith.constant 0 : i32
    %c0_i32_0 = arith.constant 0 : i32
    %c0_i32_1 = arith.constant 0 : i32
    return %c0_i32, %c0_i32_0 : i32, i32
  }
  func.func @transform_5(%arg0: i32) -> (i32, i32) {
    %c0_i32 = arith.constant 0 : i32
    %c0_i32_0 = arith.constant 0 : i32
    %c0_i32_1 = arith.constant 0 : i32
    return %c0_i32, %c0_i32_0 : i32, i32
  }
  func.func @transform_6(%arg0: i32) -> (i32, i32) {
    %c0_i32 = arith.constant 0 : i32
    %c0_i32_0 = arith.constant 0 : i32
    %c0_i32_1 = arith.constant 0 : i32
    return %c0_i32, %c0_i32_0 : i32, i32
  }
  func.func @transform_7(%arg0: i32) -> (i32, i32) {
    %c0_i32 = arith.constant 0 : i32
    %c0_i32_0 = arith.constant 0 : i32
    return %arg0, %c0_i32 : i32, i32
  }
}

</mosaic_0001>

<llo_original>
// kernel: tpu_custom_call.1
$region0: #{tpu_custom_call.1}
  #allocation0 [shape = 'u32[]', space=smem, size = 0x4, offset = 0x4, fixed_abs, tag = 'smem constant byte address 0x4 - core index']
  #allocation1 [shape = 'u32[144,128]{1,0:T(1,128)}', space=vmem, size = 0x12000, scoped, tag = 'internal scratch']
  %s0 = inlined_call_operand.vmem [shape: s32[2,16], index: 0, kind: input, shape index: {}]
  %s1 = inlined_call_operand.vmem [shape: f32[50,32], index: 1, kind: input, shape index: {}]
  %s2 = inlined_call_operand.vmem [shape: bf16[5,32,128], index: 2, kind: input, shape index: {}]
  %s3 = inlined_call_operand.vmem [shape: f32[1,128], index: 3, kind: input, shape index: {}]
  %s4 = inlined_call_operand.vmem [shape: s32[1,128], index: 4, kind: input, shape index: {}]
  %s5 = inlined_call_operand.hbm [shape: f32[128,128], index: 5, kind: input, shape index: {}]
  %s6 = inlined_call_operand.vmem [shape: f32[1,128], index: 6, kind: input, shape index: {}]
  %s7 = inlined_call_operand.hbm [shape: f32[2,128], index: 7, kind: output, shape index: {}]
  %s8 = sld [smem:[#allocation0]]
  $region42: #{tpu_custom_call.1} parent=0
    _
  %s10 = ssub.s32 1, %s8
  %s11 = scalar_select 0, %s10, %s8
  $region1: #{tpu_custom_call.1} parent=0
    #allocation2 [shape = 'u8[65536]{0}', space=vmem, size = 0x10000, scoped, tag = 'input window, operand 5, single buffered']
    #allocation3 [shape = 's32[1]{0}', space=sflag, size = 0x4, scoped, tag = 'scoped memory for tpu_custom_call.1']
    #allocation4 [shape = 's32[1]{0}', space=sflag, size = 0x4, scoped, tag = 'scoped memory for tpu_custom_call.1']
    #allocation5 [shape = 'u8[1024]{0}', space=vmem, size = 0x400, scoped, tag = 'output window, operand 0, single buffered']
    %12 = vsyncpa [#allocation3], 0
    %13 = vsyncpa [#allocation4], 0
    // Predicated region
    $region2: #{tpu_custom_call.1} parent=1 // pred_check
      _
    $region3: #{tpu_custom_call.1} parent=1 // pred_check_branch
      %15 = sbr.rel (0) target = $region5
    $region4: #{tpu_custom_call.1} parent=1 // pred_region
      _
    $region5: #{tpu_custom_call.1} parent=1 // pred_fallthru
      _
    // Predicated region
    $region6: #{tpu_custom_call.1} parent=1 // pred_check
      _
    $region7: #{tpu_custom_call.1} parent=1 // pred_check_branch
      %17 = sbr.rel (0) target = $region9
    $region8: #{tpu_custom_call.1} parent=1 // pred_region
      _
    $region9: #{tpu_custom_call.1} parent=1 // pred_fallthru
      _
    // Predicated region
    $region10: #{tpu_custom_call.1} parent=1 // pred_check
      _
    $region11: #{tpu_custom_call.1} parent=1 // pred_check_branch
      %19 = sbr.rel (0) target = $region13
    $region12: #{tpu_custom_call.1} parent=1 // pred_region
      _
    $region13: #{tpu_custom_call.1} parent=1 // pred_fallthru
      _
    // Predicated region
    $region14: #{tpu_custom_call.1} parent=1 // pred_check
      _
    $region15: #{tpu_custom_call.1} parent=1 // pred_check_branch
      %21 = sbr.rel (0) target = $region17
    $region16: #{tpu_custom_call.1} parent=1 // pred_region
      _
    $region17: #{tpu_custom_call.1} parent=1 // pred_fallthru
      _
    // Predicated region
    $region18: #{tpu_custom_call.1} parent=1 // pred_check
      _
    $region19: #{tpu_custom_call.1} parent=1 // pred_check_branch
      %23 = sbr.rel (0) target = $region21
    $region20: #{tpu_custom_call.1} parent=1 // pred_region
      _
    $region21: #{tpu_custom_call.1} parent=1 // pred_fallthru
      _
    // Predicated region
    $region22: #{tpu_custom_call.1} parent=1 // pred_check
      _
    $region23: #{tpu_custom_call.1} parent=1 // pred_check_branch
      %25 = sbr.rel (0) target = $region25
    $region24: #{tpu_custom_call.1} parent=1 // pred_region
      %s27 = ssub.s32 2048, 2048
      %28 = vsyncadd [#allocation3], %s27
      %s29 = sshll.u32 [#allocation2], 4
      %s30 = int_to_ptr.vmem [resolvable:$true] %s29
      %35 = dma.hbm_to_vmem [thread:$0]  %s5, 2048, %s30, [#allocation3], 128, 128, 8
    $region25: #{tpu_custom_call.1} parent=1 // pred_fallthru
      _
    // Predicated region
    $region26: #{tpu_custom_call.1} parent=1 // pred_check
      _
    $region27: #{tpu_custom_call.1} parent=1 // pred_check_branch
      %37 = sbr.rel (0) target = $region29
    $region28: #{tpu_custom_call.1} parent=1 // pred_region
      _
    $region29: #{tpu_custom_call.1} parent=1 // pred_fallthru
      _
    // Predicated region
    $region30: #{tpu_custom_call.1} parent=1 // pred_check
      _
    $region31: #{tpu_custom_call.1} parent=1 // pred_check_branch
      %39 = sbr.rel (0) target = $region33
    $region32: #{tpu_custom_call.1} parent=1 // pred_region
      %40 = dma.done [#allocation3], 2048
    $region33: #{tpu_custom_call.1} parent=1 // pred_fallthru
      _
    %v42 = vld [vmem:[%s0] sm:$0x3]
    %v43 = vlaneseq
    %v44 = vand.u32 %v43, 127
    %v45 = vlaneseq
    %v46 = vshrl.u32 %v45, 7
    %v47 = vsub.s32 0, %v46
    %v48 = vrot.slane %v42, %v47
    %50 = vbcast.lane.b32.xlu0 %v48, 256
    %v51 = vpop.permute.xlu0 %50
    %s53 = sor.u32 256, 8
    %54 = vbcast.lane.b32.xlu0 %v48, %s53
    %v55 = vpop.permute.xlu0 %54
    %v56 = vlaneseq
    %v57 = vshrl.u32 %v56, 7
    %v58 = vsub.s32 1, %v57
    %v59 = vrot.slane %v42, %v58
    %61 = vbcast.lane.b32.xlu0 %v59, 256
    %v62 = vpop.permute.xlu0 %61
    %s64 = sor.u32 256, 8
    %65 = vbcast.lane.b32.xlu0 %v59, %s64
    %v66 = vpop.permute.xlu0 %65
    %vm67 = vcmp.eq.s32.totalorder %v44, %v51
    %vm68 = vcmp.eq.s32.totalorder %v44, %v55
    %vm69 = vcmp.eq.s32.totalorder %v44, %v62
    %vm70 = vcmp.eq.s32.totalorder %v44, %v66
    %v71 = vsel %vm67, 1, 0
    %v72 = vsel %vm68, 1, 0
    %v73 = vsel %vm69, 1, 0
    %v74 = vsel %vm70, 1, 0
    %v75 = vcvt.s32.f32 %v71
    %v76 = vcvt.s32.f32 %v72
    %v77 = vcvt.s32.f32 %v73
    %v78 = vcvt.s32.f32 %v74
    %v79 = vld [vmem:[%s1] sm:$0xff]
    %v80 = vld [vmem:[%s1 + $0x8] sm:$0xff]
    %v81 = vld [vmem:[%s1 + $0x10] sm:$0xff]
    %v82 = vld [vmem:[%s1 + $0x18] sm:$0xff]
    %v83 = vld [vmem:[%s1 + $0x20] sm:$0xff]
    %v84 = vld [vmem:[%s1 + $0x28] sm:$0xff]
    %v85 = vld [vmem:[%s1 + $0x30] sm:$0x3]
    %vm86 = vcmask 408576
    %v88 = vsel %vm86, %v75, 0
    %v91 = vsel %vm86, %v76, 0
    %v94 = vsel %vm86, %v77, 0
    %v97 = vsel %vm86, %v78, 0
    %vm99 = vcmask 1041408
    %v101 = vsel %vm99, %v85, 0
    %103 = vmatprep.subr.mxu0 0.0
    %104 = vmatpush1.msra.mxu0 %v79
    %105 = vmatprep.subr.mxu0 0.0
    %106 = vmatpush1.msra.mxu0 %v80
    %107 = vmatprep.subr.mxu0 0.0
    %108 = vmatpush1.msra.mxu0 %v81
    %109 = vmatprep.subr.mxu0 0.0
    %110 = vmatpush1.msra.mxu0 %v82
    %111 = vmatprep.subr.mxu0 0.0
    %112 = vmatpush1.msra.mxu0 %v83
    %113 = vmatprep.subr.mxu0 0.0
    %114 = vmatpush1.msra.mxu0 %v84
    %115 = vmatprep.subr.mxu0 0.0
    %116 = vmatpush1.msra.mxu0 %v101
    %117 = vmatprep.subr.mxu0 0.0
    %118 = vmatpush1.msra.mxu0 0.0
    %119 = vmatprep.subr.mxu0 0.0
    %120 = vmatpush1.msra.mxu0 0.0
    %121 = vmatprep.subr.mxu0 0.0
    %122 = vmatpush1.msra.mxu0 0.0
    %123 = vmatprep.subr.mxu0 0.0
    %124 = vmatpush1.msra.mxu0 0.0
    %125 = vmatprep.subr.mxu0 0.0
    %126 = vmatpush1.msra.mxu0 0.0
    %127 = vmatprep.subr.mxu0 0.0
    %128 = vmatpush1.msra.mxu0 0.0
    %129 = vmatprep.subr.mxu0 0.0
    %130 = vmatpush1.msra.mxu0 0.0
    %131 = vmatprep.subr.mxu0 0.0
    %132 = vmatpush1.msra.mxu0 0.0
    %133 = vmatprep.subr.mxu0 0.0
    %134 = vmatpush1.msra.mxu0 0.0
    %135 = vmatprep.subr.mxu0 0.0
    %136 = vmatpush1.msra.mxu0 0.0
    %137 = vmatprep.subr.mxu0 0.0
    %138 = vmatpush1.msra.mxu0 0.0
    %139 = vmatprep.subr.mxu0 0.0
    %140 = vmatpush1.msra.mxu0 0.0
    %141 = vmatprep.subr.mxu0 0.0
    %142 = vmatpush1.msra.mxu0 0.0
    %143 = vmatprep.subr.mxu0 0.0
    %144 = vmatpush1.msra.mxu0 0.0
    %145 = vmatprep.subr.mxu0 0.0
    %146 = vmatpush1.msra.mxu0 0.0
    %147 = vmatprep.subr.mxu0 0.0
    %148 = vmatpush1.msra.mxu0 0.0
    %149 = vmatprep.subr.mxu0 0.0
    %150 = vmatpush1.msra.mxu0 0.0
    %151 = vmatprep.subr.mxu0 0.0
    %152 = vmatpush1.msra.mxu0 0.0
    %153 = vmatprep.subr.mxu0 0.0
    %154 = vmatpush1.msra.mxu0 0.0
    %155 = vmatprep.subr.mxu0 0.0
    %156 = vmatpush1.msra.mxu0 0.0
    %157 = vmatprep.subr.mxu0 0.0
    %158 = vmatpush1.msra.mxu0 0.0
    %159 = vmatprep.subr.mxu0 0.0
    %160 = vmatpush1.msra.mxu0 0.0
    %161 = vmatprep.subr.mxu0 0.0
    %162 = vmatpush1.msra.mxu0 0.0
    %163 = vmatprep.subr.mxu0 0.0
    %164 = vmatpush1.msra.mxu0 0.0
    %165 = vmatprep.subr.mxu0 0.0
    %166 = vmatpush1.msra.mxu0 0.0
    %167 = vmatprep.mubr.f32.mxu0 0.0
    %168 = vmatmul.mubr.f32.gmra.mrb[0].mxu0 %v88
    %v169 = vpop.f32.mrb[0].mxu0
    %v170 = vadd.f32 0.0, %v169
    %v171 = vpop.f32.mrb[0].mxu0
    %172 = vmatprep.mubr.f32.mxu0 0.0
    %173 = vmatmul.mubr.f32.gmra.mrb[0].mxu0 %v91
    %v174 = vpop.f32.mrb[0].mxu0
    %v175 = vadd.f32 0.0, %v174
    %v176 = vpop.f32.mrb[0].mxu0
    %177 = vmatprep.mubr.f32.mxu0 0.0
    %178 = vmatmul.mubr.f32.gmra.mrb[0].mxu0 %v94
    %v179 = vpop.f32.mrb[0].mxu0
    %v180 = vadd.f32 0.0, %v179
    %v181 = vpop.f32.mrb[0].mxu0
    %182 = vmatprep.mubr.f32.mxu0 0.0
    %183 = vmatmul.mubr.f32.gmra.mrb[0].mxu0 %v97
    %v184 = vpop.f32.mrb[0].mxu0
    %v185 = vadd.f32 0.0, %v184
    %v186 = vpop.f32.mrb[0].mxu0
    %187 = vdwg.mxu0
    %v193 = vcombine.high %v170, %v170
    %v194 = vcombine.high %v175, %v175
    %v195 = vcombine.high %v180, %v180
    %v196 = vcombine.high %v185, %v185
    %v197 = vcombine.low %v170, %v193
    %v198 = vcombine.low %v175, %v194
    %v199 = vcombine.low 0.0, %v180
    %v200 = vcombine.low %v195, %v185
    %v201 = vcombine.low %v196, 0.0
    %v207 = vpack.c.bf16 %v198, %v197
    %v208 = vpack.c.bf16 %v200, %v199
    %v209 = vpack.c.bf16 %v201, %v201
    %vm210 = vcmask 1043456
    %v213 = vsel %vm210, %v209, 0
    %v214 = vld [vmem:[%s2] sm:$0xf]
    %v215 = vld [vmem:[%s2 + $0x4] sm:$0xf]
    %v216 = vld [vmem:[%s2 + $0x8] sm:$0xf]
    %v217 = vld [vmem:[%s2 + $0xc] sm:$0xf]
    %s218 = scalar_lea.vmem %s2, 16
    %v219 = vld [vmem:[%s218] sm:$0xf]
    %v220 = vld [vmem:[%s218 + $0x4] sm:$0xf]
    %v221 = vld [vmem:[%s218 + $0x8] sm:$0xf]
    %v222 = vld [vmem:[%s218 + $0xc] sm:$0xf]
    %vm223 = vsmask.f32 7424
    %v225 = vshrl.u32 %v207, 16
    %v227 = vshll.u32 %v207, 16
    %v229 = vrot.slane %v227, 1
    %v230 = vor.u32 %v225, %v229
    %v232 = vshll.u32 %v208, 16
    %v234 = vrot.slane %v232, 1
    %v235 = vsel %vm223, %v230, %v234
    %v236 = vshrl.u32 %v208, 16
    %v238 = vor.u32 %v236, %v234
    %v239 = vshll.u32 %v213, 16
    %v241 = vrot.slane %v239, 1
    %v242 = vsel %vm223, %v238, %v241
    %v243 = vshrl.u32 %v213, 16
    %v245 = vor.u32 %v243, %v241
    %v250 = vunpack.c.l.b16 %v219
    %v251 = vunpack.c.l.b16 %v220
    %v252 = vunpack.c.l.b16 %v221
    %v253 = vunpack.c.l.b16 %v222
    %v254 = vpack.c.b16 %v251, %v250
    %v255 = vpack.c.b16 %v253, %v252
    %vm258 = vcmask 261120
    %v260 = vsel %vm258, %v235, 0
    %v263 = vsel %vm258, %v242, 0
    %v266 = vsel %vm258, %v245, 0
    %268 = vmatprep.subr.bf16.mxu0 0
    %269 = vmatpush1.bf16.msra.mxu0 %v254
    %270 = vmatprep.subr.bf16.mxu0 0
    %271 = vmatpush1.bf16.msra.mxu0 %v255
    %272 = vmatprep.subr.bf16.mxu0 0
    %273 = vmatpush1.bf16.msra.mxu0 0
    %274 = vmatprep.subr.bf16.mxu0 0
    %275 = vmatpush1.bf16.msra.mxu0 0
    %276 = vmatprep.subr.bf16.mxu0 0
    %277 = vmatpush1.bf16.msra.mxu0 0
    %278 = vmatprep.subr.bf16.mxu0 0
    %279 = vmatpush1.bf16.msra.mxu0 0
    %280 = vmatprep.subr.bf16.mxu0 0
    %281 = vmatpush1.bf16.msra.mxu0 0
    %282 = vmatprep.subr.bf16.mxu0 0
    %283 = vmatpush1.bf16.msra.mxu0 0
    %284 = vmatprep.subr.bf16.mxu0 0
    %285 = vmatpush1.bf16.msra.mxu0 0
    %286 = vmatprep.subr.bf16.mxu0 0
    %287 = vmatpush1.bf16.msra.mxu0 0
    %288 = vmatprep.subr.bf16.mxu0 0
    %289 = vmatpush1.bf16.msra.mxu0 0
    %290 = vmatprep.subr.bf16.mxu0 0
    %291 = vmatpush1.bf16.msra.mxu0 0
    %292 = vmatprep.subr.bf16.mxu0 0
    %293 = vmatpush1.bf16.msra.mxu0 0
    %294 = vmatprep.subr.bf16.mxu0 0
    %295 = vmatpush1.bf16.msra.mxu0 0
    %296 = vmatprep.subr.bf16.mxu0 0
    %297 = vmatpush1.bf16.msra.mxu0 0
    %298 = vmatprep.subr.bf16.mxu0 0
    %299 = vmatpush1.bf16.msra.mxu0 0
    %300 = vmatprep.mubr.bf16.mxu0 0
    %301 = vmatmul.mubr.bf16.gmra.mrb[0].mxu0 %v260
    %v302 = vpop.f32.mrb[0].mxu0
    %v303 = vadd.f32 0.0, %v302
    %v304 = vpop.f32.mrb[0].mxu0
    %v305 = vpop.f32.mrb[0].mxu0
    %v306 = vadd.f32 0.0, %v305
    %v307 = vpop.f32.mrb[0].mxu0
    %308 = vmatprep.mubr.bf16.mxu0 0
    %309 = vmatmul.mubr.bf16.gmra.mrb[0].mxu0 %v263
    %v310 = vpop.f32.mrb[0].mxu0
    %v311 = vadd.f32 0.0, %v310
    %v312 = vpop.f32.mrb[0].mxu0
    %v313 = vpop.f32.mrb[0].mxu0
    %v314 = vadd.f32 0.0, %v313
    %v315 = vpop.f32.mrb[0].mxu0
    %316 = vmatprep.mubr.bf16.mxu0 0
    %317 = vmatmul.mubr.bf16.gmra.mrb[0].mxu0 %v266
    %v318 = vpop.f32.mrb[0].mxu0
    %v319 = vadd.f32 0.0, %v318
    %v320 = vpop.f32.mrb[0].mxu0
    %v321 = vpop.f32.mrb[0].mxu0
    %v322 = vpop.f32.mrb[0].mxu0
    %323 = vdwg.mxu0
    %v328 = vunpack.c.l.b16 %v214
    %v329 = vunpack.c.l.b16 %v215
    %v330 = vunpack.c.l.b16 %v216
    %v331 = vunpack.c.l.b16 %v217
    %v332 = vpack.c.b16 %v329, %v328
    %v333 = vpack.c.b16 %v331, %v330
    %v336 = vsel %vm258, %v207, 0
    %v338 = vsel %vm258, %v208, 0
    %v340 = vsel %vm258, %v213, 0
    %342 = vmatprep.subr.bf16.mxu0 0
    %343 = vmatpush1.bf16.msra.mxu0 %v332
    %344 = vmatprep.subr.bf16.mxu0 0
    %345 = vmatpush1.bf16.msra.mxu0 %v333
    %346 = vmatprep.subr.bf16.mxu0 0
    %347 = vmatpush1.bf16.msra.mxu0 0
    %348 = vmatprep.subr.bf16.mxu0 0
    %349 = vmatpush1.bf16.msra.mxu0 0
    %350 = vmatprep.subr.bf16.mxu0 0
    %351 = vmatpush1.bf16.msra.mxu0 0
    %352 = vmatprep.subr.bf16.mxu0 0
    %353 = vmatpush1.bf16.msra.mxu0 0
    %354 = vmatprep.subr.bf16.mxu0 0
    %355 = vmatpush1.bf16.msra.mxu0 0
    %356 = vmatprep.subr.bf16.mxu0 0
    %357 = vmatpush1.bf16.msra.mxu0 0
    %358 = vmatprep.subr.bf16.mxu0 0
    %359 = vmatpush1.bf16.msra.mxu0 0
    %360 = vmatprep.subr.bf16.mxu0 0
    %361 = vmatpush1.bf16.msra.mxu0 0
    %362 = vmatprep.subr.bf16.mxu0 0
    %363 = vmatpush1.bf16.msra.mxu0 0
    %364 = vmatprep.subr.bf16.mxu0 0
    %365 = vmatpush1.bf16.msra.mxu0 0
    %366 = vmatprep.subr.bf16.mxu0 0
    %367 = vmatpush1.bf16.msra.mxu0 0
    %368 = vmatprep.subr.bf16.mxu0 0
    %369 = vmatpush1.bf16.msra.mxu0 0
    %370 = vmatprep.subr.bf16.mxu0 0
    %371 = vmatpush1.bf16.msra.mxu0 0
    %372 = vmatprep.subr.bf16.mxu0 0
    %373 = vmatpush1.bf16.msra.mxu0 0
    %374 = vmatprep.mubr.bf16.mxu0 0
    %375 = vmatmul.mubr.bf16.gmra.mrb[0].mxu0 %v336
    %v376 = vpop.f32.mrb[0].mxu0
    %v377 = vadd.f32 %v303, %v376
    %v378 = vpop.f32.mrb[0].mxu0
    %v379 = vpop.f32.mrb[0].mxu0
    %v380 = vadd.f32 %v306, %v379
    %v381 = vpop.f32.mrb[0].mxu0
    %382 = vmatprep.mubr.bf16.mxu0 0
    %383 = vmatmul.mubr.bf16.gmra.mrb[0].mxu0 %v338
    %v384 = vpop.f32.mrb[0].mxu0
    %v385 = vadd.f32 %v311, %v384
    %v386 = vpop.f32.mrb[0].mxu0
    %v387 = vpop.f32.mrb[0].mxu0
    %v388 = vadd.f32 %v314, %v387
    %v389 = vpop.f32.mrb[0].mxu0
    %390 = vmatprep.mubr.bf16.mxu0 0
    %391 = vmatmul.mubr.bf16.gmra.mrb[0].mxu0 %v340
    %v392 = vpop.f32.mrb[0].mxu0
    %v393 = vadd.f32 %v319, %v392
    %v394 = vpop.f32.mrb[0].mxu0
    %v395 = vpop.f32.mrb[0].mxu0
    %v396 = vpop.f32.mrb[0].mxu0
    %397 = vdwg.mxu0
    %s398 = scalar_lea.vmem %s2, 32
    %v399 = vld [vmem:[%s398] sm:$0xf]
    %v400 = vld [vmem:[%s398 + $0x4] sm:$0xf]
    %v401 = vld [vmem:[%s398 + $0x8] sm:$0xf]
    %v402 = vld [vmem:[%s398 + $0xc] sm:$0xf]
    %vm406 = vcmask 1046528
    %v407 = vrot.slane %v207, 1
    %v408 = vrot.slane %v208, 1
    %v409 = vsel %vm406, %v407, %v408
    %v410 = vrot.slane %v213, 1
    %v411 = vsel %vm406, %v408, %v410
    %v416 = vunpack.c.l.b16 %v399
    %v417 = vunpack.c.l.b16 %v400
    %v418 = vunpack.c.l.b16 %v401
    %v419 = vunpack.c.l.b16 %v402
    %v420 = vpack.c.b16 %v417, %v416
    %v421 = vpack.c.b16 %v419, %v418
    %v425 = vsel %vm258, %v409, 0
    %v428 = vsel %vm258, %v411, 0
    %v431 = vsel %vm258, %v410, 0
    %433 = vmatprep.subr.bf16.mxu0 0
    %434 = vmatpush1.bf16.msra.mxu0 %v420
    %435 = vmatprep.subr.bf16.mxu0 0
    %436 = vmatpush1.bf16.msra.mxu0 %v421
    %437 = vmatprep.subr.bf16.mxu0 0
    %438 = vmatpush1.bf16.msra.mxu0 0
    %439 = vmatprep.subr.bf16.mxu0 0
    %440 = vmatpush1.bf16.msra.mxu0 0
    %441 = vmatprep.subr.bf16.mxu0 0
    %442 = vmatpush1.bf16.msra.mxu0 0
    %443 = vmatprep.subr.bf16.mxu0 0
    %444 = vmatpush1.bf16.msra.mxu0 0
    %445 = vmatprep.subr.bf16.mxu0 0
    %446 = vmatpush1.bf16.msra.mxu0 0
    %447 = vmatprep.subr.bf16.mxu0 0
    %448 = vmatpush1.bf16.msra.mxu0 0
    %449 = vmatprep.subr.bf16.mxu0 0
    %450 = vmatpush1.bf16.msra.mxu0 0
    %451 = vmatprep.subr.bf16.mxu0 0
    %452 = vmatpush1.bf16.msra.mxu0 0
    %453 = vmatprep.subr.bf16.mxu0 0
    %454 = vmatpush1.bf16.msra.mxu0 0
    %455 = vmatprep.subr.bf16.mxu0 0
    %456 = vmatpush1.bf16.msra.mxu0 0
    %457 = vmatprep.subr.bf16.mxu0 0
    %458 = vmatpush1.bf16.msra.mxu0 0
    %459 = vmatprep.subr.bf16.mxu0 0
    %460 = vmatpush1.bf16.msra.mxu0 0
    %461 = vmatprep.subr.bf16.mxu0 0
    %462 = vmatpush1.bf16.msra.mxu0 0
    %463 = vmatprep.subr.bf16.mxu0 0
    %464 = vmatpush1.bf16.msra.mxu0 0
    %465 = vmatprep.mubr.bf16.mxu0 0
    %466 = vmatmul.mubr.bf16.gmra.mrb[0].mxu0 %v425
    %v467 = vpop.f32.mrb[0].mxu0
    %v468 = vadd.f32 0.0, %v467
    %v469 = vpop.f32.mrb[0].mxu0
    %v470 = vpop.f32.mrb[0].mxu0
    %v471 = vadd.f32 0.0, %v470
    %v472 = vpop.f32.mrb[0].mxu0
    %473 = vmatprep.mubr.bf16.mxu0 0
    %474 = vmatmul.mubr.bf16.gmra.mrb[0].mxu0 %v428
    %v475 = vpop.f32.mrb[0].mxu0
    %v476 = vadd.f32 0.0, %v475
    %v477 = vpop.f32.mrb[0].mxu0
    %v478 = vpop.f32.mrb[0].mxu0
    %v479 = vadd.f32 0.0, %v478
    %v480 = vpop.f32.mrb[0].mxu0
    %481 = vmatprep.mubr.bf16.mxu0 0
    %482 = vmatmul.mubr.bf16.gmra.mrb[0].mxu0 %v431
    %v483 = vpop.f32.mrb[0].mxu0
    %v484 = vadd.f32 0.0, %v483
    %v485 = vpop.f32.mrb[0].mxu0
    %v486 = vpop.f32.mrb[0].mxu0
    %v487 = vpop.f32.mrb[0].mxu0
    %488 = vdwg.mxu0
    %v489 = vadd.f32 %v377, %v468
    %v490 = vadd.f32 %v380, %v471
    %v491 = vadd.f32 %v385, %v476
    %v492 = vadd.f32 %v388, %v479
    %v493 = vadd.f32 %v393, %v484
    %s494 = scalar_lea.vmem %s2, 48
    %v495 = vld [vmem:[%s494] sm:$0xf]
    %v496 = vld [vmem:[%s494 + $0x4] sm:$0xf]
    %v497 = vld [vmem:[%s494 + $0x8] sm:$0xf]
    %v498 = vld [vmem:[%s494 + $0xc] sm:$0xf]
    %vm499 = vsmask.f32 6400
    %v500 = vrot.slane %v225, 1
    %v501 = vrot.slane %v227, 2
    %v502 = vor.u32 %v500, %v501
    %v503 = vrot.slane %v236, 1
    %v504 = vrot.slane %v232, 2
    %v505 = vor.u32 %v503, %v504
    %v506 = vsel %vm499, %v502, %v505
    %v507 = vrot.slane %v243, 1
    %v508 = vrot.slane %v239, 2
    %v509 = vor.u32 %v507, %v508
    %v510 = vsel %vm499, %v505, %v509
    %v515 = vunpack.c.l.b16 %v495
    %v516 = vunpack.c.l.b16 %v496
    %v517 = vunpack.c.l.b16 %v497
    %v518 = vunpack.c.l.b16 %v498
    %v519 = vpack.c.b16 %v516, %v515
    %v520 = vpack.c.b16 %v518, %v517
    %v524 = vsel %vm258, %v506, 0
    %v527 = vsel %vm258, %v510, 0
    %v530 = vsel %vm258, %v509, 0
    %532 = vmatprep.subr.bf16.mxu0 0
    %533 = vmatpush1.bf16.msra.mxu0 %v519
    %534 = vmatprep.subr.bf16.mxu0 0
    %535 = vmatpush1.bf16.msra.mxu0 %v520
    %536 = vmatprep.subr.bf16.mxu0 0
    %537 = vmatpush1.bf16.msra.mxu0 0
    %538 = vmatprep.subr.bf16.mxu0 0
    %539 = vmatpush1.bf16.msra.mxu0 0
    %540 = vmatprep.subr.bf16.mxu0 0
    %541 = vmatpush1.bf16.msra.mxu0 0
    %542 = vmatprep.subr.bf16.mxu0 0
    %543 = vmatpush1.bf16.msra.mxu0 0
    %544 = vmatprep.subr.bf16.mxu0 0
    %545 = vmatpush1.bf16.msra.mxu0 0
    %546 = vmatprep.subr.bf16.mxu0 0
    %547 = vmatpush1.bf16.msra.mxu0 0
    %548 = vmatprep.subr.bf16.mxu0 0
    %549 = vmatpush1.bf16.msra.mxu0 0
    %550 = vmatprep.subr.bf16.mxu0 0
    %551 = vmatpush1.bf16.msra.mxu0 0
    %552 = vmatprep.subr.bf16.mxu0 0
    %553 = vmatpush1.bf16.msra.mxu0 0
    %554 = vmatprep.subr.bf16.mxu0 0
    %555 = vmatpush1.bf16.msra.mxu0 0
    %556 = vmatprep.subr.bf16.mxu0 0
    %557 = vmatpush1.bf16.msra.mxu0 0
    %558 = vmatprep.subr.bf16.mxu0 0
    %559 = vmatpush1.bf16.msra.mxu0 0
    %560 = vmatprep.subr.bf16.mxu0 0
    %561 = vmatpush1.bf16.msra.mxu0 0
    %562 = vmatprep.subr.bf16.mxu0 0
    %563 = vmatpush1.bf16.msra.mxu0 0
    %564 = vmatprep.mubr.bf16.mxu0 0
    %565 = vmatmul.mubr.bf16.gmra.mrb[0].mxu0 %v524
    %v566 = vpop.f32.mrb[0].mxu0
    %v567 = vadd.f32 0.0, %v566
    %v568 = vpop.f32.mrb[0].mxu0
    %v569 = vpop.f32.mrb[0].mxu0
    %v570 = vadd.f32 0.0, %v569
    %v571 = vpop.f32.mrb[0].mxu0
    %572 = vmatprep.mubr.bf16.mxu0 0
    %573 = vmatmul.mubr.bf16.gmra.mrb[0].mxu0 %v527
    %v574 = vpop.f32.mrb[0].mxu0
    %v575 = vadd.f32 0.0, %v574
    %v576 = vpop.f32.mrb[0].mxu0
    %v577 = vpop.f32.mrb[0].mxu0
    %v578 = vadd.f32 0.0, %v577
    %v579 = vpop.f32.mrb[0].mxu0
    %580 = vmatprep.mubr.bf16.mxu0 0
    %581 = vmatmul.mubr.bf16.gmra.mrb[0].mxu0 %v530
    %v582 = vpop.f32.mrb[0].mxu0
    %v583 = vadd.f32 0.0, %v582
    %v584 = vpop.f32.mrb[0].mxu0
    %v585 = vpop.f32.mrb[0].mxu0
    %v586 = vpop.f32.mrb[0].mxu0
    %587 = vdwg.mxu0
    %v588 = vadd.f32 %v489, %v567
    %v589 = vadd.f32 %v490, %v570
    %v590 = vadd.f32 %v491, %v575
    %v591 = vadd.f32 %v492, %v578
    %v592 = vadd.f32 %v493, %v583
    %s593 = scalar_lea.vmem %s2, 64
    %v594 = vld [vmem:[%s593] sm:$0xf]
    %v595 = vld [vmem:[%s593 + $0x4] sm:$0xf]
    %v596 = vld [vmem:[%s593 + $0x8] sm:$0xf]
    %v597 = vld [vmem:[%s593 + $0xc] sm:$0xf]
    %vm598 = vcmask 1045504
    %v599 = vrot.slane %v207, 2
    %v600 = vrot.slane %v208, 2
    %v601 = vsel %vm598, %v599, %v600
    %v602 = vrot.slane %v213, 2
    %v603 = vsel %vm598, %v600, %v602
    %v608 = vunpack.c.l.b16 %v594
    %v609 = vunpack.c.l.b16 %v595
    %v610 = vunpack.c.l.b16 %v596
    %v611 = vunpack.c.l.b16 %v597
    %v612 = vpack.c.b16 %v609, %v608
    %v613 = vpack.c.b16 %v611, %v610
    %v617 = vsel %vm258, %v601, 0
    %v620 = vsel %vm258, %v603, 0
    %v623 = vsel %vm258, %v602, 0
    %625 = vmatprep.subr.bf16.mxu0 0
    %626 = vmatpush1.bf16.msra.mxu0 %v612
    %627 = vmatprep.subr.bf16.mxu0 0
    %628 = vmatpush1.bf16.msra.mxu0 %v613
    %629 = vmatprep.subr.bf16.mxu0 0
    %630 = vmatpush1.bf16.msra.mxu0 0
    %631 = vmatprep.subr.bf16.mxu0 0
    %632 = vmatpush1.bf16.msra.mxu0 0
    %633 = vmatprep.subr.bf16.mxu0 0
    %634 = vmatpush1.bf16.msra.mxu0 0
    %635 = vmatprep.subr.bf16.mxu0 0
    %636 = vmatpush1.bf16.msra.mxu0 0
    %637 = vmatprep.subr.bf16.mxu0 0
    %638 = vmatpush1.bf16.msra.mxu0 0
    %639 = vmatprep.subr.bf16.mxu0 0
    %640 = vmatpush1.bf16.msra.mxu0 0
    %641 = vmatprep.subr.bf16.mxu0 0
    %642 = vmatpush1.bf16.msra.mxu0 0
    %643 = vmatprep.subr.bf16.mxu0 0
    %644 = vmatpush1.bf16.msra.mxu0 0
    %645 = vmatprep.subr.bf16.mxu0 0
    %646 = vmatpush1.bf16.msra.mxu0 0
    %647 = vmatprep.subr.bf16.mxu0 0
    %648 = vmatpush1.bf16.msra.mxu0 0
    %649 = vmatprep.subr.bf16.mxu0 0
    %650 = vmatpush1.bf16.msra.mxu0 0
    %651 = vmatprep.subr.bf16.mxu0 0
    %652 = vmatpush1.bf16.msra.mxu0 0
    %653 = vmatprep.subr.bf16.mxu0 0
    %654 = vmatpush1.bf16.msra.mxu0 0
    %655 = vmatprep.subr.bf16.mxu0 0
    %656 = vmatpush1.bf16.msra.mxu0 0
    %657 = vmatprep.mubr.bf16.mxu0 0
    %658 = vmatmul.mubr.bf16.gmra.mrb[0].mxu0 %v617
    %v659 = vpop.f32.mrb[0].mxu0
    %v660 = vadd.f32 0.0, %v659
    %v661 = vpop.f32.mrb[0].mxu0
    %v662 = vpop.f32.mrb[0].mxu0
    %v663 = vadd.f32 0.0, %v662
    %v664 = vpop.f32.mrb[0].mxu0
    %665 = vmatprep.mubr.bf16.mxu0 0
    %666 = vmatmul.mubr.bf16.gmra.mrb[0].mxu0 %v620
    %v667 = vpop.f32.mrb[0].mxu0
    %v668 = vadd.f32 0.0, %v667
    %v669 = vpop.f32.mrb[0].mxu0
    %v670 = vpop.f32.mrb[0].mxu0
    %v671 = vadd.f32 0.0, %v670
    %v672 = vpop.f32.mrb[0].mxu0
    %673 = vmatprep.mubr.bf16.mxu0 0
    %674 = vmatmul.mubr.bf16.gmra.mrb[0].mxu0 %v623
    %v675 = vpop.f32.mrb[0].mxu0
    %v676 = vadd.f32 0.0, %v675
    %v677 = vpop.f32.mrb[0].mxu0
    %v678 = vpop.f32.mrb[0].mxu0
    %v679 = vpop.f32.mrb[0].mxu0
    %680 = vdwg.mxu0
    %v681 = vadd.f32 %v588, %v660
    %v682 = vadd.f32 %v589, %v663
    %v683 = vadd.f32 %v590, %v668
    %v684 = vadd.f32 %v591, %v671
    %v685 = vadd.f32 %v592, %v676
    %v686 = vld [vmem:[%s3] sm:$0x1]
    %v688 = vlaneseq
    %v689 = vshrl.u32 %v688, 7
    %v690 = vsub.s32 0, %v689
    %v691 = vrot.slane %v686, %v690
    %v693 = vadd.f32 %v681, %v691
    %v694 = vadd.f32 %v682, %v691
    %v695 = vadd.f32 %v683, %v691
    %v696 = vadd.f32 %v684, %v691
    %v697 = vadd.f32 %v685, %v691
    %v698 = vmax.f32 %v693, 0.0
    %v699 = vmax.f32 %v694, 0.0
    %v700 = vmax.f32 %v695, 0.0
    %v701 = vmax.f32 %v696, 0.0
    %v702 = vmax.f32 %v697, 0.0
    %v708 = vcombine.high %v698, %v698
    %v709 = vcombine.high %v699, %v699
    %v710 = vcombine.high %v700, %v700
    %v711 = vcombine.high %v701, %v701
    %v712 = vcombine.high %v702, %v702
    %v714 = vlaneseq
    %v715 = vshrl.u32 %v714, 7
    %v716 = vadd.s32 %v715, 8
    %v717 = vadd.s32 %v715, 16
    %v718 = vld [vmem:[%s4] sm:$0x1]
    %v719 = vlaneseq
    %v720 = vshrl.u32 %v719, 7
    %v721 = vsub.s32 0, %v720
    %v722 = vrot.slane %v718, %v721
    %vm723 = vcmp.lt.s32.totalorder %v715, %v722
    %vm724 = vcmp.lt.s32.totalorder %v716, %v722
    %vm725 = vcmp.lt.s32.totalorder %v717, %v722
    %v726 = vcombine.low %v698, %v708
    %v727 = vcombine.low %v699, %v709
    %v728 = vcombine.low %v710, %v701
    %v729 = vcombine.low %v711, %v702
    %v734 = vsel %vm723, %v726, 0.0
    %v735 = vsel %vm724, %v727, 0.0
    %v736 = vsel %vm725, %v700, 0.0
    %v737 = vsel %vm723, %v728, 0.0
    %v738 = vsel %vm724, %v729, 0.0
    %v739 = vsel %vm725, %v712, 0.0
    %v740 = vsel %vm210, %v736, -inf
    %v741 = vmax.f32 %v734, %v740
    %v742 = vmax.f32 %v741, %v735
    %v743 = vrot.slane %v742, 4
    %v744 = vmax.f32 %v742, %v743
    %v745 = vrot.slane %v744, 2
    %v746 = vmax.f32 %v744, %v745
    %v747 = vrot.slane %v746, 1
    %v748 = vmax.f32 %v746, %v747
    %v749 = vsel %vm210, %v739, -inf
    %v750 = vmax.f32 %v737, %v749
    %v751 = vmax.f32 %v750, %v738
    %v752 = vrot.slane %v751, 4
    %v753 = vmax.f32 %v751, %v752
    %v754 = vrot.slane %v753, 2
    %v755 = vmax.f32 %v753, %v754
    %v756 = vrot.slane %v755, 1
    %v757 = vmax.f32 %v755, %v756
    %v758 = vld [vmem:[#allocation2] sm:$0xff]
    %v759 = vld [vmem:[#allocation2 + $0x8] sm:$0xff]
    %v760 = vld [vmem:[#allocation2 + $0x10] sm:$0xff]
    %v761 = vld [vmem:[#allocation2 + $0x18] sm:$0xff]
    %v762 = vld [vmem:[#allocation2 + $0x20] sm:$0xff]
    %v763 = vld [vmem:[#allocation2 + $0x28] sm:$0xff]
    %v764 = vld [vmem:[#allocation2 + $0x30] sm:$0xff]
    %v765 = vld [vmem:[#allocation2 + $0x38] sm:$0xff]
    %v766 = vld [vmem:[#allocation2 + $0x40] sm:$0xff]
    %v767 = vld [vmem:[#allocation2 + $0x48] sm:$0xff]
    %v768 = vld [vmem:[#allocation2 + $0x50] sm:$0xff]
    %v769 = vld [vmem:[#allocation2 + $0x58] sm:$0xff]
    %v770 = vld [vmem:[#allocation2 + $0x60] sm:$0xff]
    %v771 = vld [vmem:[#allocation2 + $0x68] sm:$0xff]
    %v772 = vld [vmem:[#allocation2 + $0x70] sm:$0xff]
    %v773 = vld [vmem:[#allocation2 + $0x78] sm:$0xff]
    %v774 = vld [vmem:[%s6] sm:$0x1]
    %v776 = vlaneseq
    %v777 = vshrl.u32 %v776, 7
    %v778 = vsub.s32 0, %v777
    %v779 = vrot.slane %v774, %v778
    %vm783 = vcmask 1041409
    %v784 = vsel %vm783, %v757, %v748
    %786 = vmatprep.subr.mxu0 0.0
    %787 = vmatpush1.msra.mxu0 %v758
    %788 = vmatprep.subr.mxu0 0.0
    %789 = vmatpush1.msra.mxu0 %v759
    %790 = vmatprep.subr.mxu0 0.0
    %791 = vmatpush1.msra.mxu0 %v760
    %792 = vmatprep.subr.mxu0 0.0
    %793 = vmatpush1.msra.mxu0 %v761
    %794 = vmatprep.subr.mxu0 0.0
    %795 = vmatpush1.msra.mxu0 %v762
    %796 = vmatprep.subr.mxu0 0.0
    %797 = vmatpush1.msra.mxu0 %v763
    %798 = vmatprep.subr.mxu0 0.0
    %799 = vmatpush1.msra.mxu0 %v764
    %800 = vmatprep.subr.mxu0 0.0
    %801 = vmatpush1.msra.mxu0 %v765
    %802 = vmatprep.subr.mxu0 0.0
    %803 = vmatpush1.msra.mxu0 %v766
    %804 = vmatprep.subr.mxu0 0.0
    %805 = vmatpush1.msra.mxu0 %v767
    %806 = vmatprep.subr.mxu0 0.0
    %807 = vmatpush1.msra.mxu0 %v768
    %808 = vmatprep.subr.mxu0 0.0
    %809 = vmatpush1.msra.mxu0 %v769
    %810 = vmatprep.subr.mxu0 0.0
    %811 = vmatpush1.msra.mxu0 %v770
    %812 = vmatprep.subr.mxu0 0.0
    %813 = vmatpush1.msra.mxu0 %v771
    %814 = vmatprep.subr.mxu0 0.0
    %815 = vmatpush1.msra.mxu0 %v772
    %816 = vmatprep.subr.mxu0 0.0
    %817 = vmatpush1.msra.mxu0 %v773
    %818 = vmatprep.subr.mxu0 0.0
    %819 = vmatpush1.msra.mxu0 0.0
    %820 = vmatprep.subr.mxu0 0.0
    %821 = vmatpush1.msra.mxu0 0.0
    %822 = vmatprep.subr.mxu0 0.0
    %823 = vmatpush1.msra.mxu0 0.0
    %824 = vmatprep.subr.mxu0 0.0
    %825 = vmatpush1.msra.mxu0 0.0
    %826 = vmatprep.subr.mxu0 0.0
    %827 = vmatpush1.msra.mxu0 0.0
    %828 = vmatprep.subr.mxu0 0.0
    %829 = vmatpush1.msra.mxu0 0.0
    %830 = vmatprep.subr.mxu0 0.0
    %831 = vmatpush1.msra.mxu0 0.0
    %832 = vmatprep.subr.mxu0 0.0
    %833 = vmatpush1.msra.mxu0 0.0
    %834 = vmatprep.subr.mxu0 0.0
    %835 = vmatpush1.msra.mxu0 0.0
    %836 = vmatprep.subr.mxu0 0.0
    %837 = vmatpush1.msra.mxu0 0.0
    %838 = vmatprep.subr.mxu0 0.0
    %839 = vmatpush1.msra.mxu0 0.0
    %840 = vmatprep.subr.mxu0 0.0
    %841 = vmatpush1.msra.mxu0 0.0
    %842 = vmatprep.subr.mxu0 0.0
    %843 = vmatpush1.msra.mxu0 0.0
    %844 = vmatprep.subr.mxu0 0.0
    %845 = vmatpush1.msra.mxu0 0.0
    %846 = vmatprep.subr.mxu0 0.0
    %847 = vmatpush1.msra.mxu0 0.0
    %848 = vmatprep.subr.mxu0 0.0
    %849 = vmatpush1.msra.mxu0 0.0
    %850 = vmatprep.mubr.f32.mxu0 0.0
    %851 = vmatmul.mubr.f32.gmra.mrb[0].mxu0 %v784
    %v852 = vpop.f32.mrb[0].mxu0
    %v853 = vadd.f32 %v779, %v852
    %v854 = vpop.f32.mrb[0].mxu0
    %855 = vdwg.mxu0
    %856 = vst [vmem:[#allocation5] sm:$0x3] %v853
    // Predicated region
    $region34: #{tpu_custom_call.1} parent=1 // pred_check
      _
    $region35: #{tpu_custom_call.1} parent=1 // pred_check_branch
      %858 = sbr.rel (0) target = $region37
    $region36: #{tpu_custom_call.1} parent=1 // pred_region
      %s860 = ssub.s32 32, 32
      %861 = vsyncadd [#allocation4], %s860
      %s863 = sshll.u32 [#allocation5], 4
      %s864 = int_to_ptr.vmem [resolvable:$true] %s863
      %866 = dma.vmem_to_hbm [thread:$0]  %s864, 32, %s7, [#allocation4]
    $region37: #{tpu_custom_call.1} parent=1 // pred_fallthru
      _
    // Predicated region
    $region38: #{tpu_custom_call.1} parent=1 // pred_check
      _
    $region39: #{tpu_custom_call.1} parent=1 // pred_check_branch
      %868 = sbr.rel (0) target = $region41
    $region40: #{tpu_custom_call.1} parent=1 // pred_region
      %869 = dma.done [#allocation4], 32
    $region41: #{tpu_custom_call.1} parent=1 // pred_fallthru
      _
    %870 = vsyncpa [#allocation3], 1
    %871 = vsyncpa [#allocation4], 1

</llo_original>
